<compile_context>
chip_gen: v7x
topology: tpu7x:2x2x1
jax: 0.10.0
libtpu: 0.0.40
codegen_flags: <defaults>
</compile_context>

<pallas_src>
import math

import jax
import jax.numpy as jnp
from jax.experimental import pallas as pl
from jax.experimental.pallas import tpu as pltpu

# Small, module-consistent shapes.
B, L, C = 2, 8, 32
NUM_HEADS = 4
HEAD_DIM = C // NUM_HEADS
MLP_RATIO = 4
HIDDEN = C * MLP_RATIO
EPS = 1e-5
BL = B * L
NH_BL = NUM_HEADS * BL


def attention_block_kernel(x_ref, smask_ref, hmask_ref, wqkv_ref, wrest_ref,
                           w1_ref, vec_ref, bqkv_ref, b1_ref, out_ref):
    """Shapes:
      x_ref:     (BL, C)        activations (B and L flattened)
      smask_ref: (NH*BL, BL)    additive attention mask, tiled per head,
                                block-diagonal across batch (-1e9 off-block)
      hmask_ref: (NH*BL, C)     multiplicative head-channel selection mask
      wqkv_ref:  (C, 3C)        [Wq*scale | Wk | Wv]
      wrest_ref: (C+HIDDEN, C)  [Wo ; W2]   (row-stacked -> free sublane slices)
      w1_ref:    (C, HIDDEN)
      vec_ref:   (6, C)         [bo; ln1_w; ln1_b; ln2_w; ln2_b; b2]
      bqkv_ref:  (1, 3C)        [bq*scale | bk | bv]
      b1_ref:    (1, HIDDEN)
      out_ref:   (BL, C)
    """
    f32 = jnp.float32
    x = x_ref[...]

    bo = vec_ref[0:1, :]
    ln1_w = vec_ref[1:2, :]
    ln1_b = vec_ref[2:3, :]
    ln2_w = vec_ref[3:4, :]
    ln2_b = vec_ref[4:5, :]
    b2 = vec_ref[5:6, :]

    # ---- LayerNorm 1 (two-pass variance for robustness) ----
    mu = jnp.mean(x, axis=-1, keepdims=True)
    xc = x - mu
    var = jnp.mean(xc * xc, axis=-1, keepdims=True)
    h = xc * jax.lax.rsqrt(var + EPS) * ln1_w + ln1_b

    # ---- Fused QKV projection for ALL heads: one (BL,C)@(C,3C) matmul ----
    qkv = jnp.dot(h, wqkv_ref[...], preferred_element_type=f32) + bqkv_ref[...]
    q = qkv[:, 0 * C:1 * C]          # (BL, C); 1/sqrt(d) already folded in
    k = qkv[:, 1 * C:2 * C]
    v = qkv[:, 2 * C:3 * C]

    # ---- All head scores in ONE matmul ----
    # Replicate q once per head along sublanes and zero non-head channels;
    # contracting against k yields s[h*BL+i, j] = q_h[i] . k_h[j].
    hmask = hmask_ref[...]                                     # (NH*BL, C)
    q_rep = jnp.concatenate([q] * NUM_HEADS, axis=0) * hmask   # (NH*BL, C)
    s = jax.lax.dot_general(q_rep, k, (((1,), (1,)), ((), ())),
                            preferred_element_type=f32)        # (NH*BL, BL)
    s = s + smask_ref[...]

    # ---- Batched softmax over keys (one max / exp / sum / divide) ----
    s = s - jnp.max(s, axis=-1, keepdims=True)
    p = jnp.exp(s)
    p = p / jnp.sum(p, axis=-1, keepdims=True)     # exact normalization

    # ---- All head outputs in ONE matmul, then combine heads ----
    o_big = jnp.dot(p, v, preferred_element_type=f32) * hmask  # (NH*BL, C)
    attn = o_big[0:BL, :]
    for hd in range(1, NUM_HEADS):      # free sublane slices + 3 VPU adds
        attn = attn + o_big[hd * BL:(hd + 1) * BL, :]

    wo = wrest_ref[0:C, :]              # (C, C) sublane slice (aligned, free)
    x1 = x + jnp.dot(attn, wo, preferred_element_type=f32) + bo
    # (nn.Dropout layers are identity in eval mode.)

    # ---- LayerNorm 2 + MLP: Linear -> GELU -> Linear ----
    mu2 = jnp.mean(x1, axis=-1, keepdims=True)
    xc2 = x1 - mu2
    var2 = jnp.mean(xc2 * xc2, axis=-1, keepdims=True)
    h2 = xc2 * jax.lax.rsqrt(var2 + EPS) * ln2_w + ln2_b

    m = jnp.dot(h2, w1_ref[...], preferred_element_type=f32) + b1_ref[...]
    # tanh-form GELU runs on the EUP slot; nn.GELU() default is exact erf
    # (difference ~1e-4 on these O(1) activations).
    m = jax.nn.gelu(m, approximate=True)
    w2 = wrest_ref[C:C + HIDDEN, :]     # (HIDDEN, C) sublane slice (free)
    m = jnp.dot(m, w2, preferred_element_type=f32) + b2

    out_ref[...] = x1 + m               # residual 2, one dense store


def pack_inputs(params, mask):
    """One-time (init) packing of parameters and masks — kept OUT of hot path."""
    (ln1_w, ln1_b, wq, bq, wk, bk, wv, bv, wo, bo,
     ln2_w, ln2_b, w1, b1, w2, b2) = params
    scale = 1.0 / math.sqrt(HEAD_DIM)

    wqkv = jnp.concatenate([wq * scale, wk, wv], axis=1)          # (C, 3C)
    bqkv = jnp.concatenate([bq * scale, bk, bv], axis=1)          # (1, 3C)
    wrest = jnp.concatenate([wo, w2], axis=0)                     # (C+HIDDEN, C)
    vec_pack = jnp.concatenate([bo, ln1_w, ln1_b, ln2_w, ln2_b, b2], axis=0)

    # Block-diagonal additive mask over the flattened (batch, position) axis,
    # tiled once per head along sublanes.
    bi = jnp.arange(B)
    same_batch = bi[:, None, None, None] == bi[None, None, :, None]  # (B,1,B,1)
    full_mask = jnp.where(same_batch, mask[:, :, None, :],
                          jnp.float32(-1e9)).reshape(BL, BL)
    smask = jnp.tile(full_mask, (NUM_HEADS, 1))                      # (NH*BL, BL)

    # Head-channel selection mask: row block h keeps channels [h*d, (h+1)*d).
    row_head = jnp.arange(NH_BL) // BL
    col_head = jnp.arange(C) // HEAD_DIM
    hmask = (row_head[:, None] == col_head[None, :]).astype(jnp.float32)

    return (smask, hmask, wqkv, wrest, w1, vec_pack, bqkv, b1)


@jax.jit
def attention_block(x, packed):
    """x: [B, L, C] f32; packed: output of pack_inputs (built once at init)."""
    smask, hmask, wqkv, wrest, w1, vec_pack, bqkv, b1 = packed
    x2d = x.reshape(BL, C)
    vmem = pl.BlockSpec(memory_space=pltpu.MemorySpace.VMEM)
    out2d = pl.pallas_call(
        attention_block_kernel,
        out_shape=jax.ShapeDtypeStruct((BL, C), x.dtype),
        in_specs=[vmem] * 9,
        out_specs=vmem,
    )(x2d, smask, hmask, wqkv, wrest, w1, vec_pack, bqkv, b1)
    return out2d.reshape(B, L, C)


def reference(x, mask, params):
    """Pure-JAX reference mirroring the PyTorch forward (eval mode)."""
    (ln1_w, ln1_b, wq, bq, wk, bk, wv, bv, wo, bo,
     ln2_w, ln2_b, w1, b1, w2, b2) = params

    def ln(t, w, b):
        mu = t.mean(-1, keepdims=True)
        var = ((t - mu) ** 2).mean(-1, keepdims=True)
        return (t - mu) / jnp.sqrt(var + EPS) * w[0] + b[0]

    h = ln(x, ln1_w, ln1_b)
    q = (h @ wq + bq[0]).reshape(B, L, NUM_HEADS, HEAD_DIM).transpose(0, 2, 1, 3)
    k = (h @ wk + bk[0]).reshape(B, L, NUM_HEADS, HEAD_DIM).transpose(0, 2, 1, 3)
    v = (h @ wv + bv[0]).reshape(B, L, NUM_HEADS, HEAD_DIM).transpose(0, 2, 1, 3)
    s = jnp.einsum("bnld,bnmd->bnlm", q, k) / math.sqrt(HEAD_DIM) + mask[:, None]
    p = jax.nn.softmax(s, axis=-1)
    o = jnp.einsum("bnlm,bnmd->bnld", p, v).transpose(0, 2, 1, 3).reshape(B, L, C)
    o = o @ wo + bo[0]
    x1 = x + o
    h2 = ln(x1, ln2_w, ln2_b)
    m = jax.nn.gelu(h2 @ w1 + b1[0], approximate=False) @ w2 + b2[0]
    return x1 + m


def make_params(key):
    ks = jax.random.split(key, 12)
    f32 = jnp.float32
    ln1_w = jnp.ones((1, C), f32)
    ln1_b = jnp.zeros((1, C), f32)
    wq = 0.05 * jax.random.normal(ks[0], (C, C), f32)
    bq = 0.01 * jax.random.normal(ks[1], (1, C), f32)
    wk = 0.05 * jax.random.normal(ks[2], (C, C), f32)
    bk = 0.01 * jax.random.normal(ks[3], (1, C), f32)
    wv = 0.05 * jax.random.normal(ks[4], (C, C), f32)
    bv = 0.01 * jax.random.normal(ks[5], (1, C), f32)
    wo = 0.05 * jax.random.normal(ks[6], (C, C), f32)
    bo = 0.01 * jax.random.normal(ks[7], (1, C), f32)
    ln2_w = jnp.ones((1, C), f32)
    ln2_b = jnp.zeros((1, C), f32)
    w1 = 0.05 * jax.random.normal(ks[8], (C, HIDDEN), f32)
    b1 = 0.01 * jax.random.normal(ks[9], (1, HIDDEN), f32)
    w2 = 0.05 * jax.random.normal(ks[10], (HIDDEN, C), f32)
    b2 = 0.01 * jax.random.normal(ks[11], (1, C), f32)
    return (ln1_w, ln1_b, wq, bq, wk, bk, wv, bv, wo, bo,
            ln2_w, ln2_b, w1, b1, w2, b2)


if __name__ == "__main__":
    key = jax.random.PRNGKey(0)
    kx, kp = jax.random.split(key)
    x = jax.random.normal(kx, (B, L, C), jnp.float32)
    # Causal additive mask, broadcast over heads (float-mask SDPA semantics).
    causal = jnp.tril(jnp.ones((L, L), bool))
    mask = jnp.broadcast_to(jnp.where(causal, 0.0, -1e9).astype(jnp.float32),
                            (B, L, L))
    params = make_params(kp)

    # Hoisted out of the hot path: packing + mask construction happen once.
    packed = jax.tree_util.tree_map(jax.block_until_ready,
                                    pack_inputs(params, mask))

    out = attention_block(x, packed)
    out = jax.block_until_ready(out)

    ref = reference(x, mask, params)
    assert out.shape == (B, L, C) and out.dtype == jnp.float32
    # Tolerance covers TPU default-precision matmul rounding in the reference
    # plus the tanh-GELU (~1e-4); softmax normalization is now exact.
    assert jnp.allclose(out, ref, atol=2e-3, rtol=2e-3), \
        f"max abs err {jnp.max(jnp.abs(out - ref))}"
    print("KERNEL_OK")
</pallas_src>

<mosaic_0001>
module attributes {stable_mosaic.version = 11 : i64} {
  func.func @attention_block_kernel(%arg0: memref<16x32xf32, #tpu.memory_space<vmem>>, %arg1: memref<64x16xf32, #tpu.memory_space<vmem>>, %arg2: memref<64x32xf32, #tpu.memory_space<vmem>>, %arg3: memref<32x96xf32, #tpu.memory_space<vmem>>, %arg4: memref<160x32xf32, #tpu.memory_space<vmem>>, %arg5: memref<32x128xf32, #tpu.memory_space<vmem>>, %arg6: memref<6x32xf32, #tpu.memory_space<vmem>>, %arg7: memref<1x96xf32, #tpu.memory_space<vmem>>, %arg8: memref<1x128xf32, #tpu.memory_space<vmem>>, %arg9: memref<16x32xf32, #tpu.memory_space<vmem>>) attributes {dimension_semantics = [], scalar_prefetch = 0 : i64, scratch_operands = 0 : i64, tpu.core_type = #tpu.core_type<tc>} {
    %c0 = arith.constant 0 : index
    %c0_0 = arith.constant 0 : index
    %0 = vector.load %arg0[%c0, %c0_0] : memref<16x32xf32, #tpu.memory_space<vmem>>, vector<16x32xf32>
    %c0_1 = arith.constant 0 : index
    %c0_2 = arith.constant 0 : index
    %1 = vector.load %arg6[%c0_1, %c0_2] : memref<6x32xf32, #tpu.memory_space<vmem>>, vector<1x32xf32>
    %c1 = arith.constant 1 : index
    %c0_3 = arith.constant 0 : index
    %2 = vector.load %arg6[%c1, %c0_3] : memref<6x32xf32, #tpu.memory_space<vmem>>, vector<1x32xf32>
    %c2 = arith.constant 2 : index
    %c0_4 = arith.constant 0 : index
    %3 = vector.load %arg6[%c2, %c0_4] : memref<6x32xf32, #tpu.memory_space<vmem>>, vector<1x32xf32>
    %c3 = arith.constant 3 : index
    %c0_5 = arith.constant 0 : index
    %4 = vector.load %arg6[%c3, %c0_5] : memref<6x32xf32, #tpu.memory_space<vmem>>, vector<1x32xf32>
    %c4 = arith.constant 4 : index
    %c0_6 = arith.constant 0 : index
    %5 = vector.load %arg6[%c4, %c0_6] : memref<6x32xf32, #tpu.memory_space<vmem>>, vector<1x32xf32>
    %c5 = arith.constant 5 : index
    %c0_7 = arith.constant 0 : index
    %6 = vector.load %arg6[%c5, %c0_7] : memref<6x32xf32, #tpu.memory_space<vmem>>, vector<1x32xf32>
    %cst = arith.constant dense<0.000000e+00> : vector<16xf32>
    %7 = vector.multi_reduction <add>, %0, %cst [1] : vector<16x32xf32> to vector<16xf32>
    %8 = vector.shape_cast %7 : vector<16xf32> to vector<16x1xf32>
    %cst_8 = arith.constant 3.200000e+01 : f32
    %9 = vector.broadcast %cst_8 : f32 to vector<16x1xf32>
    %10 = arith.divf %8, %9 : vector<16x1xf32>
    %11 = vector.broadcast %10 : vector<16x1xf32> to vector<16x32xf32>
    %12 = arith.subf %0, %11 : vector<16x32xf32>
    %13 = arith.mulf %12, %12 : vector<16x32xf32>
    %cst_9 = arith.constant dense<0.000000e+00> : vector<16xf32>
    %14 = vector.multi_reduction <add>, %13, %cst_9 [1] : vector<16x32xf32> to vector<16xf32>
    %15 = vector.shape_cast %14 : vector<16xf32> to vector<16x1xf32>
    %cst_10 = arith.constant 3.200000e+01 : f32
    %16 = vector.broadcast %cst_10 : f32 to vector<16x1xf32>
    %17 = arith.divf %15, %16 : vector<16x1xf32>
    %cst_11 = arith.constant 9.99999974E-6 : f32
    %18 = vector.broadcast %cst_11 : f32 to vector<16x1xf32>
    %19 = arith.addf %17, %18 : vector<16x1xf32>
    %20 = math.rsqrt %19 : vector<16x1xf32>
    %21 = vector.broadcast %20 : vector<16x1xf32> to vector<16x32xf32>
    %22 = arith.mulf %12, %21 : vector<16x32xf32>
    %23 = vector.broadcast %2 : vector<1x32xf32> to vector<16x32xf32>
    %24 = arith.mulf %22, %23 : vector<16x32xf32>
    %25 = vector.broadcast %3 : vector<1x32xf32> to vector<16x32xf32>
    %26 = arith.addf %24, %25 : vector<16x32xf32>
    %c0_12 = arith.constant 0 : index
    %c0_13 = arith.constant 0 : index
    %27 = vector.load %arg3[%c0_12, %c0_13] : memref<32x96xf32, #tpu.memory_space<vmem>>, vector<32x96xf32>
    %cst_14 = arith.constant dense<0.000000e+00> : vector<16x96xf32>
    %28 = tpu.matmul %26, %27, %cst_14 {dimension_numbers = #tpu.dot_dimension_numbers<[1], [0], [0], [1], [0, 0, 1, 1], [], []>} : vector<16x32xf32>, vector<32x96xf32>, vector<16x96xf32> -> vector<16x96xf32>
    %c0_15 = arith.constant 0 : index
    %c0_16 = arith.constant 0 : index
    %29 = vector.load %arg7[%c0_15, %c0_16] : memref<1x96xf32, #tpu.memory_space<vmem>>, vector<1x96xf32>
    %30 = vector.broadcast %29 : vector<1x96xf32> to vector<16x96xf32>
    %31 = arith.addf %28, %30 : vector<16x96xf32>
    %32 = vector.extract_strided_slice %31 {offsets = [0, 0], sizes = [16, 32], strides = [1, 1]} : vector<16x96xf32> to vector<16x32xf32>
    %33 = vector.extract_strided_slice %31 {offsets = [0, 32], sizes = [16, 32], strides = [1, 1]} : vector<16x96xf32> to vector<16x32xf32>
    %34 = vector.extract_strided_slice %31 {offsets = [0, 64], sizes = [16, 32], strides = [1, 1]} : vector<16x96xf32> to vector<16x32xf32>
    %c0_17 = arith.constant 0 : index
    %c0_18 = arith.constant 0 : index
    %35 = vector.load %arg2[%c0_17, %c0_18] : memref<64x32xf32, #tpu.memory_space<vmem>>, vector<64x32xf32>
    %36 = tpu.concatenate %32, %32, %32, %32 in 0 : vector<16x32xf32>, vector<16x32xf32>, vector<16x32xf32>, vector<16x32xf32> -> vector<64x32xf32>
    %37 = arith.mulf %36, %35 : vector<64x32xf32>
    %cst_19 = arith.constant dense<0.000000e+00> : vector<64x16xf32>
    %38 = tpu.matmul %37, %33, %cst_19 {dimension_numbers = #tpu.dot_dimension_numbers<[1], [1], [0], [0], [0, 0, 1, 0], [], []>} : vector<64x32xf32>, vector<16x32xf32>, vector<64x16xf32> -> vector<64x16xf32>
    %c0_20 = arith.constant 0 : index
    %c0_21 = arith.constant 0 : index
    %39 = vector.load %arg1[%c0_20, %c0_21] : memref<64x16xf32, #tpu.memory_space<vmem>>, vector<64x16xf32>
    %40 = arith.addf %38, %39 : vector<64x16xf32>
    %cst_22 = arith.constant dense<0xFF800000> : vector<64xf32>
    %41 = vector.multi_reduction <maximumf>, %40, %cst_22 [1] : vector<64x16xf32> to vector<64xf32>
    %42 = vector.shape_cast %41 : vector<64xf32> to vector<64x1xf32>
    %43 = vector.broadcast %42 : vector<64x1xf32> to vector<64x16xf32>
    %44 = arith.subf %40, %43 : vector<64x16xf32>
    %45 = math.exp %44 : vector<64x16xf32>
    %cst_23 = arith.constant dense<0.000000e+00> : vector<64xf32>
    %46 = vector.multi_reduction <add>, %45, %cst_23 [1] : vector<64x16xf32> to vector<64xf32>
    %47 = vector.shape_cast %46 : vector<64xf32> to vector<64x1xf32>
    %48 = vector.broadcast %47 : vector<64x1xf32> to vector<64x16xf32>
    %49 = arith.divf %45, %48 : vector<64x16xf32>
    %cst_24 = arith.constant dense<0.000000e+00> : vector<64x32xf32>
    %50 = tpu.matmul %49, %34, %cst_24 {dimension_numbers = #tpu.dot_dimension_numbers<[1], [0], [0], [1], [0, 0, 1, 1], [], []>} : vector<64x16xf32>, vector<16x32xf32>, vector<64x32xf32> -> vector<64x32xf32>
    %51 = arith.mulf %50, %35 : vector<64x32xf32>
    %52 = vector.extract_strided_slice %51 {offsets = [0, 0], sizes = [16, 32], strides = [1, 1]} : vector<64x32xf32> to vector<16x32xf32>
    %53 = vector.extract_strided_slice %51 {offsets = [16, 0], sizes = [16, 32], strides = [1, 1]} : vector<64x32xf32> to vector<16x32xf32>
    %54 = arith.addf %52, %53 : vector<16x32xf32>
    %55 = vector.extract_strided_slice %51 {offsets = [32, 0], sizes = [16, 32], strides = [1, 1]} : vector<64x32xf32> to vector<16x32xf32>
    %56 = arith.addf %54, %55 : vector<16x32xf32>
    %57 = vector.extract_strided_slice %51 {offsets = [48, 0], sizes = [16, 32], strides = [1, 1]} : vector<64x32xf32> to vector<16x32xf32>
    %58 = arith.addf %56, %57 : vector<16x32xf32>
    %c0_25 = arith.constant 0 : index
    %c0_26 = arith.constant 0 : index
    %59 = vector.load %arg4[%c0_25, %c0_26] : memref<160x32xf32, #tpu.memory_space<vmem>>, vector<32x32xf32>
    %cst_27 = arith.constant dense<0.000000e+00> : vector<16x32xf32>
    %60 = tpu.matmul %58, %59, %cst_27 {dimension_numbers = #tpu.dot_dimension_numbers<[1], [0], [0], [1], [0, 0, 1, 1], [], []>} : vector<16x32xf32>, vector<32x32xf32>, vector<16x32xf32> -> vector<16x32xf32>
    %61 = arith.addf %0, %60 : vector<16x32xf32>
    %62 = vector.broadcast %1 : vector<1x32xf32> to vector<16x32xf32>
    %63 = arith.addf %61, %62 : vector<16x32xf32>
    %cst_28 = arith.constant dense<0.000000e+00> : vector<16xf32>
    %64 = vector.multi_reduction <add>, %63, %cst_28 [1] : vector<16x32xf32> to vector<16xf32>
    %65 = vector.shape_cast %64 : vector<16xf32> to vector<16x1xf32>
    %cst_29 = arith.constant 3.200000e+01 : f32
    %66 = vector.broadcast %cst_29 : f32 to vector<16x1xf32>
    %67 = arith.divf %65, %66 : vector<16x1xf32>
    %68 = vector.broadcast %67 : vector<16x1xf32> to vector<16x32xf32>
    %69 = arith.subf %63, %68 : vector<16x32xf32>
    %70 = arith.mulf %69, %69 : vector<16x32xf32>
    %cst_30 = arith.constant dense<0.000000e+00> : vector<16xf32>
    %71 = vector.multi_reduction <add>, %70, %cst_30 [1] : vector<16x32xf32> to vector<16xf32>
    %72 = vector.shape_cast %71 : vector<16xf32> to vector<16x1xf32>
    %cst_31 = arith.constant 3.200000e+01 : f32
    %73 = vector.broadcast %cst_31 : f32 to vector<16x1xf32>
    %74 = arith.divf %72, %73 : vector<16x1xf32>
    %cst_32 = arith.constant 9.99999974E-6 : f32
    %75 = vector.broadcast %cst_32 : f32 to vector<16x1xf32>
    %76 = arith.addf %74, %75 : vector<16x1xf32>
    %77 = math.rsqrt %76 : vector<16x1xf32>
    %78 = vector.broadcast %77 : vector<16x1xf32> to vector<16x32xf32>
    %79 = arith.mulf %69, %78 : vector<16x32xf32>
    %80 = vector.broadcast %4 : vector<1x32xf32> to vector<16x32xf32>
    %81 = arith.mulf %79, %80 : vector<16x32xf32>
    %82 = vector.broadcast %5 : vector<1x32xf32> to vector<16x32xf32>
    %83 = arith.addf %81, %82 : vector<16x32xf32>
    %c0_33 = arith.constant 0 : index
    %c0_34 = arith.constant 0 : index
    %84 = vector.load %arg5[%c0_33, %c0_34] : memref<32x128xf32, #tpu.memory_space<vmem>>, vector<32x128xf32>
    %cst_35 = arith.constant dense<0.000000e+00> : vector<16x128xf32>
    %85 = tpu.matmul %83, %84, %cst_35 {dimension_numbers = #tpu.dot_dimension_numbers<[1], [0], [0], [1], [0, 0, 1, 1], [], []>} : vector<16x32xf32>, vector<32x128xf32>, vector<16x128xf32> -> vector<16x128xf32>
    %c0_36 = arith.constant 0 : index
    %c0_37 = arith.constant 0 : index
    %86 = vector.load %arg8[%c0_36, %c0_37] : memref<1x128xf32, #tpu.memory_space<vmem>>, vector<1x128xf32>
    %87 = vector.broadcast %86 : vector<1x128xf32> to vector<16x128xf32>
    %88 = arith.addf %85, %87 : vector<16x128xf32>
    %89 = arith.mulf %88, %88 : vector<16x128xf32>
    %90 = arith.mulf %88, %89 : vector<16x128xf32>
    %cst_38 = arith.constant 4.471500e-02 : f32
    %91 = vector.broadcast %cst_38 : f32 to vector<16x128xf32>
    %92 = arith.mulf %91, %90 : vector<16x128xf32>
    %93 = arith.addf %88, %92 : vector<16x128xf32>
    %cst_39 = arith.constant 0.797884583 : f32
    %94 = vector.broadcast %cst_39 : f32 to vector<16x128xf32>
    %95 = arith.mulf %94, %93 : vector<16x128xf32>
    %96 = math.tanh %95 : vector<16x128xf32>
    %cst_40 = arith.constant 1.000000e+00 : f32
    %97 = vector.broadcast %cst_40 : f32 to vector<16x128xf32>
    %98 = arith.addf %97, %96 : vector<16x128xf32>
    %cst_41 = arith.constant 5.000000e-01 : f32
    %99 = vector.broadcast %cst_41 : f32 to vector<16x128xf32>
    %100 = arith.mulf %99, %98 : vector<16x128xf32>
    %101 = arith.mulf %88, %100 : vector<16x128xf32>
    %c32 = arith.constant 32 : index
    %c0_42 = arith.constant 0 : index
    %102 = vector.load %arg4[%c32, %c0_42] : memref<160x32xf32, #tpu.memory_space<vmem>>, vector<128x32xf32>
    %cst_43 = arith.constant dense<0.000000e+00> : vector<16x32xf32>
    %103 = tpu.matmul %101, %102, %cst_43 {dimension_numbers = #tpu.dot_dimension_numbers<[1], [0], [0], [1], [0, 0, 1, 1], [], []>} : vector<16x128xf32>, vector<128x32xf32>, vector<16x32xf32> -> vector<16x32xf32>
    %104 = vector.broadcast %6 : vector<1x32xf32> to vector<16x32xf32>
    %105 = arith.addf %103, %104 : vector<16x32xf32>
    %106 = arith.addf %63, %105 : vector<16x32xf32>
    %c0_44 = arith.constant 0 : index
    %c0_45 = arith.constant 0 : index
    %107 = vector.load %arg9[%c0_44, %c0_45] : memref<16x32xf32, #tpu.memory_space<vmem>>, vector<16x32xf32>
    tpu.vector_store %arg9[%c0_44, %c0_45], %106 {strides = array<i32>} : memref<16x32xf32, #tpu.memory_space<vmem>>, vector<16x32xf32>,
    return
  }
}

</mosaic_0001>

<llo_original>
// kernel: attention_block.1
$region0: #{attention_block.1}
  #allocation0 [shape = 'u32[]', space=smem, size = 0x4, offset = 0x4, fixed_abs, tag = 'smem constant byte address 0x4 - core index']
  #allocation1 [shape = 'u32[144,128]{1,0:T(1,128)}', space=vmem, size = 0x12000, scoped, tag = 'internal scratch']
  %s0 = inlined_call_operand.vmem [shape: f32[16,32], index: 0, kind: input, shape index: {}]
  %s1 = inlined_call_operand.vmem [shape: f32[64,16], index: 1, kind: input, shape index: {}]
  %s2 = inlined_call_operand.vmem [shape: f32[64,32], index: 2, kind: input, shape index: {}]
  %s3 = inlined_call_operand.vmem [shape: f32[32,96], index: 3, kind: input, shape index: {}]
  %s4 = inlined_call_operand.vmem [shape: f32[160,32], index: 4, kind: input, shape index: {}]
  %s5 = inlined_call_operand.vmem [shape: f32[32,128], index: 5, kind: input, shape index: {}]
  %s6 = inlined_call_operand.vmem [shape: f32[6,32], index: 6, kind: input, shape index: {}]
  %s7 = inlined_call_operand.vmem [shape: f32[1,96], index: 7, kind: input, shape index: {}]
  %s8 = inlined_call_operand.vmem [shape: f32[1,128], index: 8, kind: input, shape index: {}]
  %s9 = inlined_call_operand.hbm [shape: f32[16,32], index: 9, kind: output, shape index: {}]
  %s10 = sld [smem:[#allocation0]]
  $region46: #{attention_block.1} parent=0
    _
  %s12 = ssub.s32 1, %s10
  %s13 = scalar_select 0, %s12, %s10
  $region1: #{attention_block.1} parent=0
    #allocation2 [shape = 'u8[8192]{0}', space=vmem, size = 0x2000, scoped, tag = 'output window, operand 0, single buffered']
    #allocation3 [shape = 's32[1]{0}', space=sflag, size = 0x4, scoped, tag = 'scoped memory for attention_block.1']
    %14 = vsyncpa [#allocation3], 0
    // Predicated region
    $region2: #{attention_block.1} parent=1 // pred_check
      _
    $region3: #{attention_block.1} parent=1 // pred_check_branch
      %16 = sbr.rel (0) target = $region5
    $region4: #{attention_block.1} parent=1 // pred_region
      _
    $region5: #{attention_block.1} parent=1 // pred_fallthru
      _
    // Predicated region
    $region6: #{attention_block.1} parent=1 // pred_check
      _
    $region7: #{attention_block.1} parent=1 // pred_check_branch
      %18 = sbr.rel (0) target = $region9
    $region8: #{attention_block.1} parent=1 // pred_region
      _
    $region9: #{attention_block.1} parent=1 // pred_fallthru
      _
    // Predicated region
    $region10: #{attention_block.1} parent=1 // pred_check
      _
    $region11: #{attention_block.1} parent=1 // pred_check_branch
      %20 = sbr.rel (0) target = $region13
    $region12: #{attention_block.1} parent=1 // pred_region
      _
    $region13: #{attention_block.1} parent=1 // pred_fallthru
      _
    // Predicated region
    $region14: #{attention_block.1} parent=1 // pred_check
      _
    $region15: #{attention_block.1} parent=1 // pred_check_branch
      %22 = sbr.rel (0) target = $region17
    $region16: #{attention_block.1} parent=1 // pred_region
      _
    $region17: #{attention_block.1} parent=1 // pred_fallthru
      _
    // Predicated region
    $region18: #{attention_block.1} parent=1 // pred_check
      _
    $region19: #{attention_block.1} parent=1 // pred_check_branch
      %24 = sbr.rel (0) target = $region21
    $region20: #{attention_block.1} parent=1 // pred_region
      _
    $region21: #{attention_block.1} parent=1 // pred_fallthru
      _
    // Predicated region
    $region22: #{attention_block.1} parent=1 // pred_check
      _
    $region23: #{attention_block.1} parent=1 // pred_check_branch
      %26 = sbr.rel (0) target = $region25
    $region24: #{attention_block.1} parent=1 // pred_region
      _
    $region25: #{attention_block.1} parent=1 // pred_fallthru
      _
    // Predicated region
    $region26: #{attention_block.1} parent=1 // pred_check
      _
    $region27: #{attention_block.1} parent=1 // pred_check_branch
      %28 = sbr.rel (0) target = $region29
    $region28: #{attention_block.1} parent=1 // pred_region
      _
    $region29: #{attention_block.1} parent=1 // pred_fallthru
      _
    // Predicated region
    $region30: #{attention_block.1} parent=1 // pred_check
      _
    $region31: #{attention_block.1} parent=1 // pred_check_branch
      %30 = sbr.rel (0) target = $region33
    $region32: #{attention_block.1} parent=1 // pred_region
      _
    $region33: #{attention_block.1} parent=1 // pred_fallthru
      _
    // Predicated region
    $region34: #{attention_block.1} parent=1 // pred_check
      _
    $region35: #{attention_block.1} parent=1 // pred_check_branch
      %32 = sbr.rel (0) target = $region37
    $region36: #{attention_block.1} parent=1 // pred_region
      _
    $region37: #{attention_block.1} parent=1 // pred_fallthru
      _
    %v33 = vld [vmem:[%s0] sm:$0xff]
    %v34 = vld [vmem:[%s0 + $0x8] sm:$0xff]
    %v35 = vld [vmem:[%s6] sm:$0x1]
    %v36 = vld [vmem:[%s6 + $0x1] sm:$0x1]
    %v37 = vld [vmem:[%s6 + $0x2] sm:$0x1]
    %v38 = vld [vmem:[%s6 + $0x3] sm:$0x1]
    %v39 = vld [vmem:[%s6 + $0x4] sm:$0x1]
    %v40 = vld [vmem:[%s6 + $0x5] sm:$0x1]
    %vm41 = vcmask 261120
    %v42 = vsel %vm41, %v33, 0.0
    %43 = vadd.xlane.f32.xlu0 %v42
    %v44 = vpop.xlane.xlu0 %43
    %v45 = vsel %vm41, %v34, 0.0
    %46 = vadd.xlane.f32.xlu0 %v45
    %v47 = vpop.xlane.xlu0 %46
    %v48 = vrcp.pop 32.0
    %v49 = vmul.f32 %v44, %v48
    %v50 = vmul.f32 %v47, %v48
    %v51 = vsub.f32 %v33, %v49
    %v52 = vsub.f32 %v34, %v50
    %v53 = vmul.f32 %v51, %v51
    %v54 = vmul.f32 %v52, %v52
    %v55 = vsel %vm41, %v53, 0.0
    %56 = vadd.xlane.f32.xlu0 %v55
    %v57 = vpop.xlane.xlu0 %56
    %v58 = vsel %vm41, %v54, 0.0
    %59 = vadd.xlane.f32.xlu0 %v58
    %v60 = vpop.xlane.xlu0 %59
    %v61 = vmul.f32 %v57, %v48
    %v62 = vmul.f32 %v60, %v48
    %v63 = vadd.f32 %v61, 1e-05
    %v64 = vadd.f32 %v62, 1e-05
    %v65 = vrsqrt.pop %v63
    %v66 = vrsqrt.pop %v64
    %v67 = vmul.f32 %v51, %v65
    %v68 = vmul.f32 %v52, %v66
    %v69 = vlaneseq
    %v70 = vshrl.u32 %v69, 7
    %v71 = vsub.s32 0, %v70
    %v72 = vrot.slane %v36, %v71
    %v73 = vmul.f32 %v67, %v72
    %v74 = vmul.f32 %v68, %v72
    %v75 = vlaneseq
    %v76 = vshrl.u32 %v75, 7
    %v77 = vsub.s32 0, %v76
    %v78 = vrot.slane %v37, %v77
    %v79 = vadd.f32 %v73, %v78
    %v80 = vadd.f32 %v74, %v78
    %v81 = vld [vmem:[%s3] sm:$0xff]
    %v82 = vld [vmem:[%s3 + $0x8] sm:$0xff]
    %v83 = vld [vmem:[%s3 + $0x10] sm:$0xff]
    %v84 = vld [vmem:[%s3 + $0x18] sm:$0xff]
    %v85 = vld [vmem:[%s7] sm:$0x1]
    %v87 = vlaneseq
    %v88 = vshrl.u32 %v87, 7
    %v89 = vsub.s32 0, %v88
    %v90 = vrot.slane %v85, %v89
    %v93 = vsel %vm41, %v79, 0
    %v96 = vsel %vm41, %v80, 0
    %98 = vmatprep.subr.mxu0 0.0
    %99 = vmatpush1.msra.mxu0 %v81
    %100 = vmatprep.subr.mxu0 0.0
    %101 = vmatpush1.msra.mxu0 %v82
    %102 = vmatprep.subr.mxu0 0.0
    %103 = vmatpush1.msra.mxu0 %v83
    %104 = vmatprep.subr.mxu0 0.0
    %105 = vmatpush1.msra.mxu0 %v84
    %106 = vmatprep.subr.mxu0 0.0
    %107 = vmatpush1.msra.mxu0 0.0
    %108 = vmatprep.subr.mxu0 0.0
    %109 = vmatpush1.msra.mxu0 0.0
    %110 = vmatprep.subr.mxu0 0.0
    %111 = vmatpush1.msra.mxu0 0.0
    %112 = vmatprep.subr.mxu0 0.0
    %113 = vmatpush1.msra.mxu0 0.0
    %114 = vmatprep.subr.mxu0 0.0
    %115 = vmatpush1.msra.mxu0 0.0
    %116 = vmatprep.subr.mxu0 0.0
    %117 = vmatpush1.msra.mxu0 0.0
    %118 = vmatprep.subr.mxu0 0.0
    %119 = vmatpush1.msra.mxu0 0.0
    %120 = vmatprep.subr.mxu0 0.0
    %121 = vmatpush1.msra.mxu0 0.0
    %122 = vmatprep.subr.mxu0 0.0
    %123 = vmatpush1.msra.mxu0 0.0
    %124 = vmatprep.subr.mxu0 0.0
    %125 = vmatpush1.msra.mxu0 0.0
    %126 = vmatprep.subr.mxu0 0.0
    %127 = vmatpush1.msra.mxu0 0.0
    %128 = vmatprep.subr.mxu0 0.0
    %129 = vmatpush1.msra.mxu0 0.0
    %130 = vmatprep.subr.mxu0 0.0
    %131 = vmatpush1.msra.mxu0 0.0
    %132 = vmatprep.subr.mxu0 0.0
    %133 = vmatpush1.msra.mxu0 0.0
    %134 = vmatprep.subr.mxu0 0.0
    %135 = vmatpush1.msra.mxu0 0.0
    %136 = vmatprep.subr.mxu0 0.0
    %137 = vmatpush1.msra.mxu0 0.0
    %138 = vmatprep.subr.mxu0 0.0
    %139 = vmatpush1.msra.mxu0 0.0
    %140 = vmatprep.subr.mxu0 0.0
    %141 = vmatpush1.msra.mxu0 0.0
    %142 = vmatprep.subr.mxu0 0.0
    %143 = vmatpush1.msra.mxu0 0.0
    %144 = vmatprep.subr.mxu0 0.0
    %145 = vmatpush1.msra.mxu0 0.0
    %146 = vmatprep.subr.mxu0 0.0
    %147 = vmatpush1.msra.mxu0 0.0
    %148 = vmatprep.subr.mxu0 0.0
    %149 = vmatpush1.msra.mxu0 0.0
    %150 = vmatprep.subr.mxu0 0.0
    %151 = vmatpush1.msra.mxu0 0.0
    %152 = vmatprep.subr.mxu0 0.0
    %153 = vmatpush1.msra.mxu0 0.0
    %154 = vmatprep.subr.mxu0 0.0
    %155 = vmatpush1.msra.mxu0 0.0
    %156 = vmatprep.subr.mxu0 0.0
    %157 = vmatpush1.msra.mxu0 0.0
    %158 = vmatprep.subr.mxu0 0.0
    %159 = vmatpush1.msra.mxu0 0.0
    %160 = vmatprep.subr.mxu0 0.0
    %161 = vmatpush1.msra.mxu0 0.0
    %162 = vmatprep.mubr.f32.mxu0 0.0
    %163 = vmatmul.mubr.f32.gmra.mrb[0].mxu0 %v93
    %v164 = vpop.f32.mrb[0].mxu0
    %v165 = vadd.f32 %v90, %v164
    %v166 = vpop.f32.mrb[0].mxu0
    %167 = vmatprep.mubr.f32.mxu0 0.0
    %168 = vmatmul.mubr.f32.gmra.mrb[0].mxu0 %v96
    %v169 = vpop.f32.mrb[0].mxu0
    %v170 = vadd.f32 %v90, %v169
    %v171 = vpop.f32.mrb[0].mxu0
    %172 = vdwg.mxu0
    %v173 = vld [vmem:[%s2] sm:$0xff]
    %v174 = vld [vmem:[%s2 + $0x8] sm:$0xff]
    %v175 = vld [vmem:[%s2 + $0x10] sm:$0xff]
    %v176 = vld [vmem:[%s2 + $0x18] sm:$0xff]
    %v177 = vld [vmem:[%s2 + $0x20] sm:$0xff]
    %v178 = vld [vmem:[%s2 + $0x28] sm:$0xff]
    %v179 = vld [vmem:[%s2 + $0x30] sm:$0xff]
    %v180 = vld [vmem:[%s2 + $0x38] sm:$0xff]
    %v181 = vmul.f32 %v165, %v173
    %v182 = vmul.f32 %v170, %v174
    %v183 = vmul.f32 %v165, %v175
    %v184 = vmul.f32 %v170, %v176
    %v185 = vmul.f32 %v165, %v177
    %v186 = vmul.f32 %v170, %v178
    %v187 = vmul.f32 %v165, %v179
    %v188 = vmul.f32 %v170, %v180
    %v189 = vld [vmem:[%s1] sm:$0xff]
    %v190 = vld [vmem:[%s1 + $0x8] sm:$0xff]
    %v191 = vld [vmem:[%s1 + $0x10] sm:$0xff]
    %v192 = vld [vmem:[%s1 + $0x18] sm:$0xff]
    %v193 = vld [vmem:[%s1 + $0x20] sm:$0xff]
    %v194 = vld [vmem:[%s1 + $0x28] sm:$0xff]
    %v195 = vld [vmem:[%s1 + $0x30] sm:$0xff]
    %v196 = vld [vmem:[%s1 + $0x38] sm:$0xff]
    %199 = vrot.lane.b32.xlu0 %v165, 96
    %v200 = vpop.permute.xlu0 %199
    %201 = vrot.lane.b32.xlu0 %v170, 96
    %v202 = vpop.permute.xlu0 %201
    %v204 = vsel %vm41, %v181, 0
    %v207 = vsel %vm41, %v182, 0
    %v210 = vsel %vm41, %v183, 0
    %v213 = vsel %vm41, %v184, 0
    %v216 = vsel %vm41, %v185, 0
    %v219 = vsel %vm41, %v186, 0
    %v222 = vsel %vm41, %v187, 0
    %v225 = vsel %vm41, %v188, 0
    %v227 = vsel %vm41, %v200, 0
    %v229 = vsel %vm41, %v202, 0
    %231 = vmatprep.subr.mxu0 0.0
    %232 = vmatpush1.xpose.msra.mxu0 %v227
    %233 = vmatprep.subr.mxu0 0.0
    %234 = vmatpush1.xpose.msra.mxu0 %v229
    %235 = vmatprep.subr.mxu0 0.0
    %236 = vmatpush1.xpose.msra.mxu0 0.0
    %237 = vmatprep.subr.mxu0 0.0
    %238 = vmatpush1.xpose.msra.mxu0 0.0
    %239 = vmatprep.subr.mxu0 0.0
    %240 = vmatpush1.xpose.msra.mxu0 0.0
    %241 = vmatprep.subr.mxu0 0.0
    %242 = vmatpush1.xpose.msra.mxu0 0.0
    %243 = vmatprep.subr.mxu0 0.0
    %244 = vmatpush1.xpose.msra.mxu0 0.0
    %245 = vmatprep.subr.mxu0 0.0
    %246 = vmatpush1.xpose.msra.mxu0 0.0
    %247 = vmatprep.subr.mxu0 0.0
    %248 = vmatpush1.xpose.msra.mxu0 0.0
    %249 = vmatprep.subr.mxu0 0.0
    %250 = vmatpush1.xpose.msra.mxu0 0.0
    %251 = vmatprep.subr.mxu0 0.0
    %252 = vmatpush1.xpose.msra.mxu0 0.0
    %253 = vmatprep.subr.mxu0 0.0
    %254 = vmatpush1.xpose.msra.mxu0 0.0
    %255 = vmatprep.subr.mxu0 0.0
    %256 = vmatpush1.xpose.msra.mxu0 0.0
    %257 = vmatprep.subr.mxu0 0.0
    %258 = vmatpush1.xpose.msra.mxu0 0.0
    %259 = vmatprep.subr.mxu0 0.0
    %260 = vmatpush1.xpose.msra.mxu0 0.0
    %261 = vmatprep.subr.mxu0 0.0
    %262 = vmatpush1.xpose.msra.mxu0 0.0
    %263 = vmatprep.subr.mxu0 0.0
    %264 = vmatpush1.xpose.msra.mxu0 0.0
    %265 = vmatprep.subr.mxu0 0.0
    %266 = vmatpush1.xpose.msra.mxu0 0.0
    %267 = vmatprep.subr.mxu0 0.0
    %268 = vmatpush1.xpose.msra.mxu0 0.0
    %269 = vmatprep.subr.mxu0 0.0
    %270 = vmatpush1.xpose.msra.mxu0 0.0
    %271 = vmatprep.subr.mxu0 0.0
    %272 = vmatpush1.xpose.msra.mxu0 0.0
    %273 = vmatprep.subr.mxu0 0.0
    %274 = vmatpush1.xpose.msra.mxu0 0.0
    %275 = vmatprep.subr.mxu0 0.0
    %276 = vmatpush1.xpose.msra.mxu0 0.0
    %277 = vmatprep.subr.mxu0 0.0
    %278 = vmatpush1.xpose.msra.mxu0 0.0
    %279 = vmatprep.subr.mxu0 0.0
    %280 = vmatpush1.xpose.msra.mxu0 0.0
    %281 = vmatprep.subr.mxu0 0.0
    %282 = vmatpush1.xpose.msra.mxu0 0.0
    %283 = vmatprep.subr.mxu0 0.0
    %284 = vmatpush1.xpose.msra.mxu0 0.0
    %285 = vmatprep.subr.mxu0 0.0
    %286 = vmatpush1.xpose.msra.mxu0 0.0
    %287 = vmatprep.subr.mxu0 0.0
    %288 = vmatpush1.xpose.msra.mxu0 0.0
    %289 = vmatprep.subr.mxu0 0.0
    %290 = vmatpush1.xpose.msra.mxu0 0.0
    %291 = vmatprep.subr.mxu0 0.0
    %292 = vmatpush1.xpose.msra.mxu0 0.0
    %293 = vmatprep.subr.mxu0 0.0
    %294 = vmatpush1.xpose.msra.mxu0 0.0
    %295 = vmatprep.mubr.f32.mxu0 0.0
    %296 = vmatmul.mubr.f32.gmra.mrb[0].mxu0 %v204
    %v297 = vpop.f32.mrb[0].mxu0
    %v298 = vadd.f32 %v189, %v297
    %v299 = vpop.f32.mrb[0].mxu0
    %300 = vmatprep.mubr.f32.mxu0 0.0
    %301 = vmatmul.mubr.f32.gmra.mrb[0].mxu0 %v207
    %v302 = vpop.f32.mrb[0].mxu0
    %v303 = vadd.f32 %v190, %v302
    %v304 = vpop.f32.mrb[0].mxu0
    %305 = vmatprep.mubr.f32.mxu0 0.0
    %306 = vmatmul.mubr.f32.gmra.mrb[0].mxu0 %v210
    %v307 = vpop.f32.mrb[0].mxu0
    %v308 = vadd.f32 %v191, %v307
    %v309 = vpop.f32.mrb[0].mxu0
    %310 = vmatprep.mubr.f32.mxu0 0.0
    %311 = vmatmul.mubr.f32.gmra.mrb[0].mxu0 %v213
    %v312 = vpop.f32.mrb[0].mxu0
    %v313 = vadd.f32 %v192, %v312
    %v314 = vpop.f32.mrb[0].mxu0
    %315 = vmatprep.mubr.f32.mxu0 0.0
    %316 = vmatmul.mubr.f32.gmra.mrb[0].mxu0 %v216
    %v317 = vpop.f32.mrb[0].mxu0
    %v318 = vadd.f32 %v193, %v317
    %v319 = vpop.f32.mrb[0].mxu0
    %320 = vmatprep.mubr.f32.mxu0 0.0
    %321 = vmatmul.mubr.f32.gmra.mrb[0].mxu0 %v219
    %v322 = vpop.f32.mrb[0].mxu0
    %v323 = vadd.f32 %v194, %v322
    %v324 = vpop.f32.mrb[0].mxu0
    %325 = vmatprep.mubr.f32.mxu0 0.0
    %326 = vmatmul.mubr.f32.gmra.mrb[0].mxu0 %v222
    %v327 = vpop.f32.mrb[0].mxu0
    %v328 = vadd.f32 %v195, %v327
    %v329 = vpop.f32.mrb[0].mxu0
    %330 = vmatprep.mubr.f32.mxu0 0.0
    %331 = vmatmul.mubr.f32.gmra.mrb[0].mxu0 %v225
    %v332 = vpop.f32.mrb[0].mxu0
    %v333 = vadd.f32 %v196, %v332
    %v334 = vpop.f32.mrb[0].mxu0
    %335 = vdwg.mxu0
    %vm336 = vcmask 130048
    %v337 = vsel %vm336, %v298, -inf
    %338 = vmax.xlane.f32.xlu0 %v337
    %v339 = vpop.xlane.xlu0 %338
    %v340 = vsel %vm336, %v303, -inf
    %341 = vmax.xlane.f32.xlu0 %v340
    %v342 = vpop.xlane.xlu0 %341
    %v343 = vsel %vm336, %v308, -inf
    %344 = vmax.xlane.f32.xlu0 %v343
    %v345 = vpop.xlane.xlu0 %344
    %v346 = vsel %vm336, %v313, -inf
    %347 = vmax.xlane.f32.xlu0 %v346
    %v348 = vpop.xlane.xlu0 %347
    %v349 = vsel %vm336, %v318, -inf
    %350 = vmax.xlane.f32.xlu0 %v349
    %v351 = vpop.xlane.xlu0 %350
    %v352 = vsel %vm336, %v323, -inf
    %353 = vmax.xlane.f32.xlu0 %v352
    %v354 = vpop.xlane.xlu0 %353
    %v355 = vsel %vm336, %v328, -inf
    %356 = vmax.xlane.f32.xlu0 %v355
    %v357 = vpop.xlane.xlu0 %356
    %v358 = vsel %vm336, %v333, -inf
    %359 = vmax.xlane.f32.xlu0 %v358
    %v360 = vpop.xlane.xlu0 %359
    %v361 = vsub.f32 %v298, %v339
    %v362 = vsub.f32 %v303, %v342
    %v363 = vsub.f32 %v308, %v345
    %v364 = vsub.f32 %v313, %v348
    %v365 = vsub.f32 %v318, %v351
    %v366 = vsub.f32 %v323, %v354
    %v367 = vsub.f32 %v328, %v357
    %v368 = vsub.f32 %v333, %v360
    %v369 = vmul.f32 %v361, 1.442695
    %v370 = vpow.pop %v369
    %v371 = vmul.f32 %v362, 1.442695
    %v372 = vpow.pop %v371
    %v373 = vmul.f32 %v363, 1.442695
    %v374 = vpow.pop %v373
    %v375 = vmul.f32 %v364, 1.442695
    %v376 = vpow.pop %v375
    %v377 = vmul.f32 %v365, 1.442695
    %v378 = vpow.pop %v377
    %v379 = vmul.f32 %v366, 1.442695
    %v380 = vpow.pop %v379
    %v381 = vmul.f32 %v367, 1.442695
    %v382 = vpow.pop %v381
    %v383 = vmul.f32 %v368, 1.442695
    %v384 = vpow.pop %v383
    %v385 = vsel %vm336, %v370, 0.0
    %386 = vadd.xlane.f32.xlu0 %v385
    %v387 = vpop.xlane.xlu0 %386
    %v388 = vsel %vm336, %v372, 0.0
    %389 = vadd.xlane.f32.xlu0 %v388
    %v390 = vpop.xlane.xlu0 %389
    %v391 = vsel %vm336, %v374, 0.0
    %392 = vadd.xlane.f32.xlu0 %v391
    %v393 = vpop.xlane.xlu0 %392
    %v394 = vsel %vm336, %v376, 0.0
    %395 = vadd.xlane.f32.xlu0 %v394
    %v396 = vpop.xlane.xlu0 %395
    %v397 = vsel %vm336, %v378, 0.0
    %398 = vadd.xlane.f32.xlu0 %v397
    %v399 = vpop.xlane.xlu0 %398
    %v400 = vsel %vm336, %v380, 0.0
    %401 = vadd.xlane.f32.xlu0 %v400
    %v402 = vpop.xlane.xlu0 %401
    %v403 = vsel %vm336, %v382, 0.0
    %404 = vadd.xlane.f32.xlu0 %v403
    %v405 = vpop.xlane.xlu0 %404
    %v406 = vsel %vm336, %v384, 0.0
    %407 = vadd.xlane.f32.xlu0 %v406
    %v408 = vpop.xlane.xlu0 %407
    %v409 = vrcp.pop %v387
    %v410 = vmul.f32 %v370, %v409
    %v411 = vrcp.pop %v390
    %v412 = vmul.f32 %v372, %v411
    %v413 = vrcp.pop %v393
    %v414 = vmul.f32 %v374, %v413
    %v415 = vrcp.pop %v396
    %v416 = vmul.f32 %v376, %v415
    %v417 = vrcp.pop %v399
    %v418 = vmul.f32 %v378, %v417
    %v419 = vrcp.pop %v402
    %v420 = vmul.f32 %v380, %v419
    %v421 = vrcp.pop %v405
    %v422 = vmul.f32 %v382, %v421
    %v423 = vrcp.pop %v408
    %v424 = vmul.f32 %v384, %v423
    %425 = vrot.lane.b32.xlu0 %v165, 64
    %v426 = vpop.permute.xlu0 %425
    %427 = vrot.lane.b32.xlu0 %v170, 64
    %v428 = vpop.permute.xlu0 %427
    %v432 = vsel %vm336, %v410, 0
    %v435 = vsel %vm336, %v412, 0
    %v438 = vsel %vm336, %v414, 0
    %v441 = vsel %vm336, %v416, 0
    %v444 = vsel %vm336, %v418, 0
    %v447 = vsel %vm336, %v420, 0
    %v450 = vsel %vm336, %v422, 0
    %v453 = vsel %vm336, %v424, 0
    %455 = vmatprep.subr.mxu0 0.0
    %456 = vmatpush1.msra.mxu0 %v426
    %457 = vmatprep.subr.mxu0 0.0
    %458 = vmatpush1.msra.mxu0 %v428
    %459 = vmatprep.subr.mxu0 0.0
    %460 = vmatpush1.msra.mxu0 0.0
    %461 = vmatprep.subr.mxu0 0.0
    %462 = vmatpush1.msra.mxu0 0.0
    %463 = vmatprep.subr.mxu0 0.0
    %464 = vmatpush1.msra.mxu0 0.0
    %465 = vmatprep.subr.mxu0 0.0
    %466 = vmatpush1.msra.mxu0 0.0
    %467 = vmatprep.subr.mxu0 0.0
    %468 = vmatpush1.msra.mxu0 0.0
    %469 = vmatprep.subr.mxu0 0.0
    %470 = vmatpush1.msra.mxu0 0.0
    %471 = vmatprep.subr.mxu0 0.0
    %472 = vmatpush1.msra.mxu0 0.0
    %473 = vmatprep.subr.mxu0 0.0
    %474 = vmatpush1.msra.mxu0 0.0
    %475 = vmatprep.subr.mxu0 0.0
    %476 = vmatpush1.msra.mxu0 0.0
    %477 = vmatprep.subr.mxu0 0.0
    %478 = vmatpush1.msra.mxu0 0.0
    %479 = vmatprep.subr.mxu0 0.0
    %480 = vmatpush1.msra.mxu0 0.0
    %481 = vmatprep.subr.mxu0 0.0
    %482 = vmatpush1.msra.mxu0 0.0
    %483 = vmatprep.subr.mxu0 0.0
    %484 = vmatpush1.msra.mxu0 0.0
    %485 = vmatprep.subr.mxu0 0.0
    %486 = vmatpush1.msra.mxu0 0.0
    %487 = vmatprep.subr.mxu0 0.0
    %488 = vmatpush1.msra.mxu0 0.0
    %489 = vmatprep.subr.mxu0 0.0
    %490 = vmatpush1.msra.mxu0 0.0
    %491 = vmatprep.subr.mxu0 0.0
    %492 = vmatpush1.msra.mxu0 0.0
    %493 = vmatprep.subr.mxu0 0.0
    %494 = vmatpush1.msra.mxu0 0.0
    %495 = vmatprep.subr.mxu0 0.0
    %496 = vmatpush1.msra.mxu0 0.0
    %497 = vmatprep.subr.mxu0 0.0
    %498 = vmatpush1.msra.mxu0 0.0
    %499 = vmatprep.subr.mxu0 0.0
    %500 = vmatpush1.msra.mxu0 0.0
    %501 = vmatprep.subr.mxu0 0.0
    %502 = vmatpush1.msra.mxu0 0.0
    %503 = vmatprep.subr.mxu0 0.0
    %504 = vmatpush1.msra.mxu0 0.0
    %505 = vmatprep.subr.mxu0 0.0
    %506 = vmatpush1.msra.mxu0 0.0
    %507 = vmatprep.subr.mxu0 0.0
    %508 = vmatpush1.msra.mxu0 0.0
    %509 = vmatprep.subr.mxu0 0.0
    %510 = vmatpush1.msra.mxu0 0.0
    %511 = vmatprep.subr.mxu0 0.0
    %512 = vmatpush1.msra.mxu0 0.0
    %513 = vmatprep.subr.mxu0 0.0
    %514 = vmatpush1.msra.mxu0 0.0
    %515 = vmatprep.subr.mxu0 0.0
    %516 = vmatpush1.msra.mxu0 0.0
    %517 = vmatprep.subr.mxu0 0.0
    %518 = vmatpush1.msra.mxu0 0.0
    %519 = vmatprep.mubr.f32.mxu0 0.0
    %520 = vmatmul.mubr.f32.gmra.mrb[0].mxu0 %v432
    %v521 = vpop.f32.mrb[0].mxu0
    %v522 = vadd.f32 0.0, %v521
    %v523 = vpop.f32.mrb[0].mxu0
    %524 = vmatprep.mubr.f32.mxu0 0.0
    %525 = vmatmul.mubr.f32.gmra.mrb[0].mxu0 %v435
    %v526 = vpop.f32.mrb[0].mxu0
    %v527 = vadd.f32 0.0, %v526
    %v528 = vpop.f32.mrb[0].mxu0
    %529 = vmatprep.mubr.f32.mxu0 0.0
    %530 = vmatmul.mubr.f32.gmra.mrb[0].mxu0 %v438
    %v531 = vpop.f32.mrb[0].mxu0
    %v532 = vadd.f32 0.0, %v531
    %v533 = vpop.f32.mrb[0].mxu0
    %534 = vmatprep.mubr.f32.mxu0 0.0
    %535 = vmatmul.mubr.f32.gmra.mrb[0].mxu0 %v441
    %v536 = vpop.f32.mrb[0].mxu0
    %v537 = vadd.f32 0.0, %v536
    %v538 = vpop.f32.mrb[0].mxu0
    %539 = vmatprep.mubr.f32.mxu0 0.0
    %540 = vmatmul.mubr.f32.gmra.mrb[0].mxu0 %v444
    %v541 = vpop.f32.mrb[0].mxu0
    %v542 = vadd.f32 0.0, %v541
    %v543 = vpop.f32.mrb[0].mxu0
    %544 = vmatprep.mubr.f32.mxu0 0.0
    %545 = vmatmul.mubr.f32.gmra.mrb[0].mxu0 %v447
    %v546 = vpop.f32.mrb[0].mxu0
    %v547 = vadd.f32 0.0, %v546
    %v548 = vpop.f32.mrb[0].mxu0
    %549 = vmatprep.mubr.f32.mxu0 0.0
    %550 = vmatmul.mubr.f32.gmra.mrb[0].mxu0 %v450
    %v551 = vpop.f32.mrb[0].mxu0
    %v552 = vadd.f32 0.0, %v551
    %v553 = vpop.f32.mrb[0].mxu0
    %554 = vmatprep.mubr.f32.mxu0 0.0
    %555 = vmatmul.mubr.f32.gmra.mrb[0].mxu0 %v453
    %v556 = vpop.f32.mrb[0].mxu0
    %v557 = vadd.f32 0.0, %v556
    %v558 = vpop.f32.mrb[0].mxu0
    %559 = vdwg.mxu0
    %v560 = vmul.f32 %v522, %v173
    %v561 = vmul.f32 %v527, %v174
    %v562 = vmul.f32 %v532, %v175
    %v563 = vmul.f32 %v537, %v176
    %v564 = vmul.f32 %v542, %v177
    %v565 = vmul.f32 %v547, %v178
    %v566 = vmul.f32 %v552, %v179
    %v567 = vmul.f32 %v557, %v180
    %v568 = vadd.f32 %v560, %v562
    %v569 = vadd.f32 %v561, %v563
    %v570 = vadd.f32 %v568, %v564
    %v571 = vadd.f32 %v569, %v565
    %v572 = vadd.f32 %v570, %v566
    %v573 = vadd.f32 %v571, %v567
    %v574 = vld [vmem:[%s4] sm:$0xff]
    %v575 = vld [vmem:[%s4 + $0x8] sm:$0xff]
    %v576 = vld [vmem:[%s4 + $0x10] sm:$0xff]
    %v577 = vld [vmem:[%s4 + $0x18] sm:$0xff]
    %v579 = vsel %vm41, %v572, 0
    %v582 = vsel %vm41, %v573, 0
    %584 = vmatprep.subr.mxu0 0.0
    %585 = vmatpush1.msra.mxu0 %v574
    %586 = vmatprep.subr.mxu0 0.0
    %587 = vmatpush1.msra.mxu0 %v575
    %588 = vmatprep.subr.mxu0 0.0
    %589 = vmatpush1.msra.mxu0 %v576
    %590 = vmatprep.subr.mxu0 0.0
    %591 = vmatpush1.msra.mxu0 %v577
    %592 = vmatprep.subr.mxu0 0.0
    %593 = vmatpush1.msra.mxu0 0.0
    %594 = vmatprep.subr.mxu0 0.0
    %595 = vmatpush1.msra.mxu0 0.0
    %596 = vmatprep.subr.mxu0 0.0
    %597 = vmatpush1.msra.mxu0 0.0
    %598 = vmatprep.subr.mxu0 0.0
    %599 = vmatpush1.msra.mxu0 0.0
    %600 = vmatprep.subr.mxu0 0.0
    %601 = vmatpush1.msra.mxu0 0.0
    %602 = vmatprep.subr.mxu0 0.0
    %603 = vmatpush1.msra.mxu0 0.0
    %604 = vmatprep.subr.mxu0 0.0
    %605 = vmatpush1.msra.mxu0 0.0
    %606 = vmatprep.subr.mxu0 0.0
    %607 = vmatpush1.msra.mxu0 0.0
    %608 = vmatprep.subr.mxu0 0.0
    %609 = vmatpush1.msra.mxu0 0.0
    %610 = vmatprep.subr.mxu0 0.0
    %611 = vmatpush1.msra.mxu0 0.0
    %612 = vmatprep.subr.mxu0 0.0
    %613 = vmatpush1.msra.mxu0 0.0
    %614 = vmatprep.subr.mxu0 0.0
    %615 = vmatpush1.msra.mxu0 0.0
    %616 = vmatprep.subr.mxu0 0.0
    %617 = vmatpush1.msra.mxu0 0.0
    %618 = vmatprep.subr.mxu0 0.0
    %619 = vmatpush1.msra.mxu0 0.0
    %620 = vmatprep.subr.mxu0 0.0
    %621 = vmatpush1.msra.mxu0 0.0
    %622 = vmatprep.subr.mxu0 0.0
    %623 = vmatpush1.msra.mxu0 0.0
    %624 = vmatprep.subr.mxu0 0.0
    %625 = vmatpush1.msra.mxu0 0.0
    %626 = vmatprep.subr.mxu0 0.0
    %627 = vmatpush1.msra.mxu0 0.0
    %628 = vmatprep.subr.mxu0 0.0
    %629 = vmatpush1.msra.mxu0 0.0
    %630 = vmatprep.subr.mxu0 0.0
    %631 = vmatpush1.msra.mxu0 0.0
    %632 = vmatprep.subr.mxu0 0.0
    %633 = vmatpush1.msra.mxu0 0.0
    %634 = vmatprep.subr.mxu0 0.0
    %635 = vmatpush1.msra.mxu0 0.0
    %636 = vmatprep.subr.mxu0 0.0
    %637 = vmatpush1.msra.mxu0 0.0
    %638 = vmatprep.subr.mxu0 0.0
    %639 = vmatpush1.msra.mxu0 0.0
    %640 = vmatprep.subr.mxu0 0.0
    %641 = vmatpush1.msra.mxu0 0.0
    %642 = vmatprep.subr.mxu0 0.0
    %643 = vmatpush1.msra.mxu0 0.0
    %644 = vmatprep.subr.mxu0 0.0
    %645 = vmatpush1.msra.mxu0 0.0
    %646 = vmatprep.subr.mxu0 0.0
    %647 = vmatpush1.msra.mxu0 0.0
    %648 = vmatprep.mubr.f32.mxu0 0.0
    %649 = vmatmul.mubr.f32.gmra.mrb[0].mxu0 %v579
    %v650 = vpop.f32.mrb[0].mxu0
    %v651 = vadd.f32 0.0, %v650
    %v652 = vpop.f32.mrb[0].mxu0
    %653 = vmatprep.mubr.f32.mxu0 0.0
    %654 = vmatmul.mubr.f32.gmra.mrb[0].mxu0 %v582
    %v655 = vpop.f32.mrb[0].mxu0
    %v656 = vadd.f32 0.0, %v655
    %v657 = vpop.f32.mrb[0].mxu0
    %658 = vdwg.mxu0
    %v659 = vadd.f32 %v33, %v651
    %v660 = vadd.f32 %v34, %v656
    %v661 = vlaneseq
    %v662 = vshrl.u32 %v661, 7
    %v663 = vsub.s32 0, %v662
    %v664 = vrot.slane %v35, %v663
    %v665 = vadd.f32 %v659, %v664
    %v666 = vadd.f32 %v660, %v664
    %v667 = vsel %vm41, %v665, 0.0
    %668 = vadd.xlane.f32.xlu0 %v667
    %v669 = vpop.xlane.xlu0 %668
    %v670 = vsel %vm41, %v666, 0.0
    %671 = vadd.xlane.f32.xlu0 %v670
    %v672 = vpop.xlane.xlu0 %671
    %v673 = vmul.f32 %v669, %v48
    %v674 = vmul.f32 %v672, %v48
    %v675 = vsub.f32 %v665, %v673
    %v676 = vsub.f32 %v666, %v674
    %v677 = vmul.f32 %v675, %v675
    %v678 = vmul.f32 %v676, %v676
    %v679 = vsel %vm41, %v677, 0.0
    %680 = vadd.xlane.f32.xlu0 %v679
    %v681 = vpop.xlane.xlu0 %680
    %v682 = vsel %vm41, %v678, 0.0
    %683 = vadd.xlane.f32.xlu0 %v682
    %v684 = vpop.xlane.xlu0 %683
    %v685 = vmul.f32 %v681, %v48
    %v686 = vmul.f32 %v684, %v48
    %v687 = vadd.f32 %v685, 1e-05
    %v688 = vadd.f32 %v686, 1e-05
    %v689 = vrsqrt.pop %v687
    %v690 = vrsqrt.pop %v688
    %v691 = vmul.f32 %v675, %v689
    %v692 = vmul.f32 %v676, %v690
    %v693 = vlaneseq
    %v694 = vshrl.u32 %v693, 7
    %v695 = vsub.s32 0, %v694
    %v696 = vrot.slane %v38, %v695
    %v697 = vmul.f32 %v691, %v696
    %v698 = vmul.f32 %v692, %v696
    %v699 = vlaneseq
    %v700 = vshrl.u32 %v699, 7
    %v701 = vsub.s32 0, %v700
    %v702 = vrot.slane %v39, %v701
    %v703 = vadd.f32 %v697, %v702
    %v704 = vadd.f32 %v698, %v702
    %v705 = vld [vmem:[%s5] sm:$0xff]
    %v706 = vld [vmem:[%s5 + $0x8] sm:$0xff]
    %v707 = vld [vmem:[%s5 + $0x10] sm:$0xff]
    %v708 = vld [vmem:[%s5 + $0x18] sm:$0xff]
    %v709 = vld [vmem:[%s8] sm:$0x1]
    %v711 = vlaneseq
    %v712 = vshrl.u32 %v711, 7
    %v713 = vsub.s32 0, %v712
    %v714 = vrot.slane %v709, %v713
    %v717 = vsel %vm41, %v703, 0
    %v720 = vsel %vm41, %v704, 0
    %722 = vmatprep.subr.mxu0 0.0
    %723 = vmatpush1.msra.mxu0 %v705
    %724 = vmatprep.subr.mxu0 0.0
    %725 = vmatpush1.msra.mxu0 %v706
    %726 = vmatprep.subr.mxu0 0.0
    %727 = vmatpush1.msra.mxu0 %v707
    %728 = vmatprep.subr.mxu0 0.0
    %729 = vmatpush1.msra.mxu0 %v708
    %730 = vmatprep.subr.mxu0 0.0
    %731 = vmatpush1.msra.mxu0 0.0
    %732 = vmatprep.subr.mxu0 0.0
    %733 = vmatpush1.msra.mxu0 0.0
    %734 = vmatprep.subr.mxu0 0.0
    %735 = vmatpush1.msra.mxu0 0.0
    %736 = vmatprep.subr.mxu0 0.0
    %737 = vmatpush1.msra.mxu0 0.0
    %738 = vmatprep.subr.mxu0 0.0
    %739 = vmatpush1.msra.mxu0 0.0
    %740 = vmatprep.subr.mxu0 0.0
    %741 = vmatpush1.msra.mxu0 0.0
    %742 = vmatprep.subr.mxu0 0.0
    %743 = vmatpush1.msra.mxu0 0.0
    %744 = vmatprep.subr.mxu0 0.0
    %745 = vmatpush1.msra.mxu0 0.0
    %746 = vmatprep.subr.mxu0 0.0
    %747 = vmatpush1.msra.mxu0 0.0
    %748 = vmatprep.subr.mxu0 0.0
    %749 = vmatpush1.msra.mxu0 0.0
    %750 = vmatprep.subr.mxu0 0.0
    %751 = vmatpush1.msra.mxu0 0.0
    %752 = vmatprep.subr.mxu0 0.0
    %753 = vmatpush1.msra.mxu0 0.0
    %754 = vmatprep.subr.mxu0 0.0
    %755 = vmatpush1.msra.mxu0 0.0
    %756 = vmatprep.subr.mxu0 0.0
    %757 = vmatpush1.msra.mxu0 0.0
    %758 = vmatprep.subr.mxu0 0.0
    %759 = vmatpush1.msra.mxu0 0.0
    %760 = vmatprep.subr.mxu0 0.0
    %761 = vmatpush1.msra.mxu0 0.0
    %762 = vmatprep.subr.mxu0 0.0
    %763 = vmatpush1.msra.mxu0 0.0
    %764 = vmatprep.subr.mxu0 0.0
    %765 = vmatpush1.msra.mxu0 0.0
    %766 = vmatprep.subr.mxu0 0.0
    %767 = vmatpush1.msra.mxu0 0.0
    %768 = vmatprep.subr.mxu0 0.0
    %769 = vmatpush1.msra.mxu0 0.0
    %770 = vmatprep.subr.mxu0 0.0
    %771 = vmatpush1.msra.mxu0 0.0
    %772 = vmatprep.subr.mxu0 0.0
    %773 = vmatpush1.msra.mxu0 0.0
    %774 = vmatprep.subr.mxu0 0.0
    %775 = vmatpush1.msra.mxu0 0.0
    %776 = vmatprep.subr.mxu0 0.0
    %777 = vmatpush1.msra.mxu0 0.0
    %778 = vmatprep.subr.mxu0 0.0
    %779 = vmatpush1.msra.mxu0 0.0
    %780 = vmatprep.subr.mxu0 0.0
    %781 = vmatpush1.msra.mxu0 0.0
    %782 = vmatprep.subr.mxu0 0.0
    %783 = vmatpush1.msra.mxu0 0.0
    %784 = vmatprep.subr.mxu0 0.0
    %785 = vmatpush1.msra.mxu0 0.0
    %786 = vmatprep.mubr.f32.mxu0 0.0
    %787 = vmatmul.mubr.f32.gmra.mrb[0].mxu0 %v717
    %v788 = vpop.f32.mrb[0].mxu0
    %v789 = vadd.f32 %v714, %v788
    %v790 = vpop.f32.mrb[0].mxu0
    %791 = vmatprep.mubr.f32.mxu0 0.0
    %792 = vmatmul.mubr.f32.gmra.mrb[0].mxu0 %v720
    %v793 = vpop.f32.mrb[0].mxu0
    %v794 = vadd.f32 %v714, %v793
    %v795 = vpop.f32.mrb[0].mxu0
    %796 = vdwg.mxu0
    %v797 = vmul.f32 %v789, %v789
    %v798 = vmul.f32 %v794, %v794
    %v799 = vmul.f32 %v789, %v797
    %v800 = vmul.f32 %v794, %v798
    %v801 = vmul.f32 %v799, 0.044715
    %v802 = vmul.f32 %v800, 0.044715
    %v803 = vadd.f32 %v789, %v801
    %v804 = vadd.f32 %v794, %v802
    %v805 = vmul.f32 %v803, 0.7978846
    %v806 = vmul.f32 %v804, 0.7978846
    %v807 = vtanh.pop %v805
    %v808 = vtanh.pop %v806
    %v809 = vadd.f32 %v807, 1.0
    %v810 = vadd.f32 %v808, 1.0
    %v811 = vmul.f32 %v809, 0.5
    %v812 = vmul.f32 %v810, 0.5
    %v813 = vmul.f32 %v789, %v811
    %v814 = vmul.f32 %v794, %v812
    %v815 = vld [vmem:[%s4 + $0x20] sm:$0xff]
    %v816 = vld [vmem:[%s4 + $0x28] sm:$0xff]
    %v817 = vld [vmem:[%s4 + $0x30] sm:$0xff]
    %v818 = vld [vmem:[%s4 + $0x38] sm:$0xff]
    %v819 = vld [vmem:[%s4 + $0x40] sm:$0xff]
    %v820 = vld [vmem:[%s4 + $0x48] sm:$0xff]
    %v821 = vld [vmem:[%s4 + $0x50] sm:$0xff]
    %v822 = vld [vmem:[%s4 + $0x58] sm:$0xff]
    %v823 = vld [vmem:[%s4 + $0x60] sm:$0xff]
    %v824 = vld [vmem:[%s4 + $0x68] sm:$0xff]
    %v825 = vld [vmem:[%s4 + $0x70] sm:$0xff]
    %v826 = vld [vmem:[%s4 + $0x78] sm:$0xff]
    %v827 = vld [vmem:[%s4 + $0x80] sm:$0xff]
    %v828 = vld [vmem:[%s4 + $0x88] sm:$0xff]
    %v829 = vld [vmem:[%s4 + $0x90] sm:$0xff]
    %v830 = vld [vmem:[%s4 + $0x98] sm:$0xff]
    %v831 = vlaneseq
    %v832 = vshrl.u32 %v831, 7
    %v833 = vsub.s32 0, %v832
    %v834 = vrot.slane %v40, %v833
    %835 = vmatprep.subr.mxu0 0.0
    %836 = vmatpush1.msra.mxu0 %v815
    %837 = vmatprep.subr.mxu0 0.0
    %838 = vmatpush1.msra.mxu0 %v816
    %839 = vmatprep.subr.mxu0 0.0
    %840 = vmatpush1.msra.mxu0 %v817
    %841 = vmatprep.subr.mxu0 0.0
    %842 = vmatpush1.msra.mxu0 %v818
    %843 = vmatprep.subr.mxu0 0.0
    %844 = vmatpush1.msra.mxu0 %v819
    %845 = vmatprep.subr.mxu0 0.0
    %846 = vmatpush1.msra.mxu0 %v820
    %847 = vmatprep.subr.mxu0 0.0
    %848 = vmatpush1.msra.mxu0 %v821
    %849 = vmatprep.subr.mxu0 0.0
    %850 = vmatpush1.msra.mxu0 %v822
    %851 = vmatprep.subr.mxu0 0.0
    %852 = vmatpush1.msra.mxu0 %v823
    %853 = vmatprep.subr.mxu0 0.0
    %854 = vmatpush1.msra.mxu0 %v824
    %855 = vmatprep.subr.mxu0 0.0
    %856 = vmatpush1.msra.mxu0 %v825
    %857 = vmatprep.subr.mxu0 0.0
    %858 = vmatpush1.msra.mxu0 %v826
    %859 = vmatprep.subr.mxu0 0.0
    %860 = vmatpush1.msra.mxu0 %v827
    %861 = vmatprep.subr.mxu0 0.0
    %862 = vmatpush1.msra.mxu0 %v828
    %863 = vmatprep.subr.mxu0 0.0
    %864 = vmatpush1.msra.mxu0 %v829
    %865 = vmatprep.subr.mxu0 0.0
    %866 = vmatpush1.msra.mxu0 %v830
    %867 = vmatprep.subr.mxu0 0.0
    %868 = vmatpush1.msra.mxu0 0.0
    %869 = vmatprep.subr.mxu0 0.0
    %870 = vmatpush1.msra.mxu0 0.0
    %871 = vmatprep.subr.mxu0 0.0
    %872 = vmatpush1.msra.mxu0 0.0
    %873 = vmatprep.subr.mxu0 0.0
    %874 = vmatpush1.msra.mxu0 0.0
    %875 = vmatprep.subr.mxu0 0.0
    %876 = vmatpush1.msra.mxu0 0.0
    %877 = vmatprep.subr.mxu0 0.0
    %878 = vmatpush1.msra.mxu0 0.0
    %879 = vmatprep.subr.mxu0 0.0
    %880 = vmatpush1.msra.mxu0 0.0
    %881 = vmatprep.subr.mxu0 0.0
    %882 = vmatpush1.msra.mxu0 0.0
    %883 = vmatprep.subr.mxu0 0.0
    %884 = vmatpush1.msra.mxu0 0.0
    %885 = vmatprep.subr.mxu0 0.0
    %886 = vmatpush1.msra.mxu0 0.0
    %887 = vmatprep.subr.mxu0 0.0
    %888 = vmatpush1.msra.mxu0 0.0
    %889 = vmatprep.subr.mxu0 0.0
    %890 = vmatpush1.msra.mxu0 0.0
    %891 = vmatprep.subr.mxu0 0.0
    %892 = vmatpush1.msra.mxu0 0.0
    %893 = vmatprep.subr.mxu0 0.0
    %894 = vmatpush1.msra.mxu0 0.0
    %895 = vmatprep.subr.mxu0 0.0
    %896 = vmatpush1.msra.mxu0 0.0
    %897 = vmatprep.subr.mxu0 0.0
    %898 = vmatpush1.msra.mxu0 0.0
    %899 = vmatprep.mubr.f32.mxu0 0.0
    %900 = vmatmul.mubr.f32.gmra.mrb[0].mxu0 %v813
    %v901 = vpop.f32.mrb[0].mxu0
    %v902 = vadd.f32 %v834, %v901
    %v903 = vpop.f32.mrb[0].mxu0
    %904 = vmatprep.mubr.f32.mxu0 0.0
    %905 = vmatmul.mubr.f32.gmra.mrb[0].mxu0 %v814
    %v906 = vpop.f32.mrb[0].mxu0
    %v907 = vadd.f32 %v834, %v906
    %v908 = vpop.f32.mrb[0].mxu0
    %909 = vdwg.mxu0
    %v910 = vadd.f32 %v665, %v902
    %v911 = vadd.f32 %v666, %v907
    %912 = vst.msk [vmem:[#allocation2] sm:$0xff] %vm41, %v910
    %913 = vst.msk [vmem:[#allocation2 + $0x8] sm:$0xff] %vm41, %v911
    // Predicated region
    $region38: #{attention_block.1} parent=1 // pred_check
      _
    $region39: #{attention_block.1} parent=1 // pred_check_branch
      %915 = sbr.rel (0) target = $region41
    $region40: #{attention_block.1} parent=1 // pred_region
      %s917 = ssub.s32 256, 256
      %918 = vsyncadd [#allocation3], %s917
      %s919 = sshll.u32 [#allocation2], 4
      %s920 = int_to_ptr.vmem [resolvable:$true] %s919
      %925 = dma.vmem_to_hbm [thread:$0]  %s920, 256, %s9, [#allocation3], 128, 128, 8
    $region41: #{attention_block.1} parent=1 // pred_fallthru
      _
    // Predicated region
    $region42: #{attention_block.1} parent=1 // pred_check
      _
    $region43: #{attention_block.1} parent=1 // pred_check_branch
      %927 = sbr.rel (0) target = $region45
    $region44: #{attention_block.1} parent=1 // pred_region
      %928 = dma.done [#allocation3], 256
    $region45: #{attention_block.1} parent=1 // pred_fallthru
      _
    %929 = vsyncpa [#allocation3], 1

</llo_original>
